<compile_context>
chip_gen: v6e
topology: v6e:2x2x1
jax: 0.10.0
libtpu: 0.0.40
codegen_flags: <defaults>
</compile_context>

<pallas_src>
import functools
import math

import jax
import jax.numpy as jnp
from jax.experimental import pallas as pl
from jax.experimental.pallas import tpu as pltpu


def _round_up(n, m):
    return ((n + m - 1) // m) * m


def _mlp_kernel(n_layers, x_ref, *refs):
    """Fused MLP over one batch tile.

    refs = (w0, b0, w1, b1, ..., w_{L-1}, b_{L-1}, out_ref)
    x is cast to bf16 in-kernel; weights bf16, biases f32, accumulation f32.
    """
    out_ref = refs[-1]
    param_refs = refs[:-1]

    h = x_ref[...].astype(jnp.bfloat16)              # (TB, s0) — cast here, not in wrapper
    for j in range(n_layers):
        w = param_refs[2 * j][...]                   # bf16 (K_j, N_j)
        b = param_refs[2 * j + 1][...]               # f32  (1, N_j)
        acc = jnp.dot(h, w, preferred_element_type=jnp.float32) + b
        if j < n_layers - 1:
            acc = jnp.maximum(acc, 0.0)              # hidden activation: ReLU (f32 VPU, v5e-safe)
            h = acc.astype(jnp.bfloat16)             # back to bf16 for the next MXU pass
        else:
            h = acc                                  # final layer: identity
    out_ref[...] = h.astype(out_ref.dtype)


def _pick_batch_tile(batch, *, max_tile=1024, target_tiles=8):
    """Batch tile: multiple of 8, sized for >= target_tiles grid steps (pipeline depth
    per core + minimal padding waste), capped at max_tile for large batches."""
    tb = _round_up(max(pl.cdiv(batch, target_tiles), 8), 8)
    return min(tb, max_tile)


def plain_mlp_forward(x, params, *, max_batch_tile=1024, target_tiles=8):
    """x: (batch, sizes[0]); params: list of (W (in,out), b (out,)) per Linear layer."""
    n_layers = len(params)
    batch, s0 = x.shape

    # Logical feature dims; pad ONLY hidden dims to 128 (input/output keep true width,
    # so x is read unpadded and the output store is only dims[-1] lanes wide).
    dims = [s0] + [w.shape[1] for w, _ in params]
    pdims = [dims[0]] + [_round_up(d, 128) for d in dims[1:-1]] + [dims[-1]]

    tb = _pick_batch_tile(batch, max_tile=max_batch_tile, target_tiles=target_tiles)
    n_tiles = pl.cdiv(batch, tb)   # non-divisible batch: last tile's OOB rows are masked on store

    # Pad + cast parameters (tiny, one-time). Zero rows/cols in W and zero bias lanes
    # keep padded hidden lanes exactly 0 through every layer.
    flat = []
    for j, (w, b) in enumerate(params):
        kin, kout = pdims[j], pdims[j + 1]
        wp = jnp.zeros((kin, kout), jnp.bfloat16)
        wp = wp.at[: w.shape[0], : w.shape[1]].set(w.astype(jnp.bfloat16))
        bp = jnp.zeros((1, kout), jnp.float32)
        bp = bp.at[0, : b.shape[0]].set(b.astype(jnp.float32))
        flat += [wp, bp]

    # BlockSpecs: x/out pipeline over the batch grid; parameters are resident
    # (constant block index -> fetched once, re-used across all batch tiles).
    in_specs = [pl.BlockSpec((tb, pdims[0]), lambda i: (i, 0))]
    for j in range(n_layers):
        in_specs.append(pl.BlockSpec((pdims[j], pdims[j + 1]), lambda i: (0, 0)))
        in_specs.append(pl.BlockSpec((1, pdims[j + 1]), lambda i: (0, 0)))
    out_spec = pl.BlockSpec((tb, pdims[-1]), lambda i: (i, 0))

    # VMEM budget: double-buffered x/out tiles, parameters budgeted at 2x (default
    # pipeline buffering), plus f32 intermediate headroom. Cap at 48 MiB so v7x
    # (64 MiB physical per TC) keeps compiler/internal-scratch headroom.
    param_bytes = sum(int(a.size) * a.dtype.itemsize for a in flat)
    max_feat = max(pdims)
    step_bytes = (
        2 * tb * pdims[0] * x.dtype.itemsize      # x tile, double-buffered
        + 2 * tb * pdims[-1] * 4                  # out tile f32, double-buffered
        + 2 * param_bytes                         # resident weights/biases (x2 buffering)
        + 4 * tb * max_feat * 4                   # f32/bf16 intermediates headroom
    )
    vmem_limit = int(min(max(2 * step_bytes, 32 * 1024 * 1024), 48 * 1024 * 1024))

    # Cost hint for XLA scheduling around the custom call.
    flops = 2 * n_tiles * tb * sum(pdims[j] * pdims[j + 1] for j in range(n_layers))
    bytes_accessed = int(x.size * x.dtype.itemsize + param_bytes + batch * pdims[-1] * 4)
    cost = pl.CostEstimate(flops=flops, transcendentals=0, bytes_accessed=bytes_accessed)

    out = pl.pallas_call(
        functools.partial(_mlp_kernel, n_layers),
        out_shape=jax.ShapeDtypeStruct((batch, pdims[-1]), jnp.float32),
        grid=(n_tiles,),
        in_specs=in_specs,
        out_specs=out_spec,
        compiler_params=pltpu.CompilerParams(
            dimension_semantics=("parallel",),      # megacore / 2-TC sharding on v7x
            vmem_limit_bytes=vmem_limit,
        ),
        cost_estimate=cost,
    )(x, *flat)

    # Output already has the true shape (batch, sizes[-1]) — no slice/pad cleanup needed.
    return out.astype(x.dtype)


def init_params(key, sizes):
    """Deterministic init mimicking nn.Linear default (uniform +/- 1/sqrt(fan_in))."""
    params = []
    for j in range(len(sizes) - 1):
        fan_in, fan_out = sizes[j], sizes[j + 1]
        key, kw, kb = jax.random.split(key, 3)
        bound = 1.0 / math.sqrt(fan_in)
        w = jax.random.uniform(kw, (fan_in, fan_out), jnp.float32, -bound, bound)
        b = jax.random.uniform(kb, (fan_out,), jnp.float32, -bound, bound)
        params.append((w, b))
    return params


def plain_mlp_ref(x, params):
    """Pure-JAX reference mirroring the kernel's numerics (bf16 MXU inputs, f32 accumulate)."""
    h = x.astype(jnp.bfloat16)
    for j, (w, b) in enumerate(params):
        acc = jnp.dot(h, w.astype(jnp.bfloat16),
                      preferred_element_type=jnp.float32) + b.astype(jnp.float32)
        if j < len(params) - 1:
            acc = jnp.maximum(acc, 0.0)
            h = acc.astype(jnp.bfloat16)
        else:
            h = acc
    return h.astype(x.dtype)


if __name__ == "__main__":
    sizes = [32, 64, 64, 16]      # sizes passed to PlainMLP.__init__
    batch = 320                   # -> TB=40, 8 grid steps, zero batch-padding waste

    key = jax.random.PRNGKey(0)
    key, kx = jax.random.split(key)
    x = jax.random.normal(kx, (batch, sizes[0]), jnp.float32)
    params = init_params(key, sizes)

    out = jax.block_until_ready(plain_mlp_forward(x, params))

    ref = plain_mlp_ref(x, params)
    assert out.shape == (batch, sizes[-1])
    assert jnp.allclose(out, ref, atol=1e-2, rtol=1e-2), "mismatch vs JAX reference"

    print("KERNEL_OK")
</pallas_src>

<mosaic_0001>
module attributes {stable_mosaic.version = 11 : i64} {
  func.func @_mlp_kernel(%arg0: i32, %arg1: memref<40x32xf32, #tpu.memory_space<vmem>>, %arg2: memref<32x128xbf16, #tpu.memory_space<vmem>>, %arg3: memref<1x128xf32, #tpu.memory_space<vmem>>, %arg4: memref<128x128xbf16, #tpu.memory_space<vmem>>, %arg5: memref<1x128xf32, #tpu.memory_space<vmem>>, %arg6: memref<128x16xbf16, #tpu.memory_space<vmem>>, %arg7: memref<1x16xf32, #tpu.memory_space<vmem>>, %arg8: memref<40x16xf32, #tpu.memory_space<vmem>>) attributes {dimension_semantics = [#tpu.dimension_semantics<parallel>], iteration_bounds = array<i64: 8>, scalar_prefetch = 0 : i64, scratch_operands = 0 : i64, tpu.core_type = #tpu.core_type<tc>, window_params = [{transform_indices = @transform_0, window_bounds = array<i64: 40, 32>}, {pipeline_mode = #tpu.pipeline_mode<synchronous>, transform_indices = @transform_1, window_bounds = array<i64: 32, 128>}, {pipeline_mode = #tpu.pipeline_mode<synchronous>, transform_indices = @transform_2, window_bounds = array<i64: 1, 128>}, {pipeline_mode = #tpu.pipeline_mode<synchronous>, transform_indices = @transform_3, window_bounds = array<i64: 128, 128>}, {pipeline_mode = #tpu.pipeline_mode<synchronous>, transform_indices = @transform_4, window_bounds = array<i64: 1, 128>}, {pipeline_mode = #tpu.pipeline_mode<synchronous>, transform_indices = @transform_5, window_bounds = array<i64: 128, 16>}, {pipeline_mode = #tpu.pipeline_mode<synchronous>, transform_indices = @transform_6, window_bounds = array<i64: 1, 16>}, {transform_indices = @transform_7, window_bounds = array<i64: 40, 16>}]} {
    %c0 = arith.constant 0 : index
    %c0_0 = arith.constant 0 : index
    %0 = vector.load %arg1[%c0, %c0_0] : memref<40x32xf32, #tpu.memory_space<vmem>>, vector<40x32xf32>
    %1 = arith.truncf %0 : vector<40x32xf32> to vector<40x32xbf16>
    %c0_1 = arith.constant 0 : index
    %c0_2 = arith.constant 0 : index
    %2 = vector.load %arg2[%c0_1, %c0_2] : memref<32x128xbf16, #tpu.memory_space<vmem>>, vector<32x128xbf16>
    %c0_3 = arith.constant 0 : index
    %c0_4 = arith.constant 0 : index
    %3 = vector.load %arg3[%c0_3, %c0_4] : memref<1x128xf32, #tpu.memory_space<vmem>>, vector<1x128xf32>
    %cst = arith.constant dense<0.000000e+00> : vector<40x128xf32>
    %4 = tpu.matmul %1, %2, %cst {dimension_numbers = #tpu.dot_dimension_numbers<[1], [0], [0], [1], [0, 0, 1, 1], [], []>} : vector<40x32xbf16>, vector<32x128xbf16>, vector<40x128xf32> -> vector<40x128xf32>
    %5 = vector.broadcast %3 : vector<1x128xf32> to vector<40x128xf32>
    %6 = arith.addf %4, %5 : vector<40x128xf32>
    %cst_5 = arith.constant 0.000000e+00 : f32
    %7 = vector.broadcast %cst_5 : f32 to vector<40x128xf32>
    %8 = arith.maximumf %6, %7 : vector<40x128xf32>
    %9 = arith.truncf %8 : vector<40x128xf32> to vector<40x128xbf16>
    %c0_6 = arith.constant 0 : index
    %c0_7 = arith.constant 0 : index
    %10 = vector.load %arg4[%c0_6, %c0_7] : memref<128x128xbf16, #tpu.memory_space<vmem>>, vector<128x128xbf16>
    %c0_8 = arith.constant 0 : index
    %c0_9 = arith.constant 0 : index
    %11 = vector.load %arg5[%c0_8, %c0_9] : memref<1x128xf32, #tpu.memory_space<vmem>>, vector<1x128xf32>
    %cst_10 = arith.constant dense<0.000000e+00> : vector<40x128xf32>
    %12 = tpu.matmul %9, %10, %cst_10 {dimension_numbers = #tpu.dot_dimension_numbers<[1], [0], [0], [1], [0, 0, 1, 1], [], []>} : vector<40x128xbf16>, vector<128x128xbf16>, vector<40x128xf32> -> vector<40x128xf32>
    %13 = vector.broadcast %11 : vector<1x128xf32> to vector<40x128xf32>
    %14 = arith.addf %12, %13 : vector<40x128xf32>
    %cst_11 = arith.constant 0.000000e+00 : f32
    %15 = vector.broadcast %cst_11 : f32 to vector<40x128xf32>
    %16 = arith.maximumf %14, %15 : vector<40x128xf32>
    %17 = arith.truncf %16 : vector<40x128xf32> to vector<40x128xbf16>
    %c0_12 = arith.constant 0 : index
    %c0_13 = arith.constant 0 : index
    %18 = vector.load %arg6[%c0_12, %c0_13] : memref<128x16xbf16, #tpu.memory_space<vmem>>, vector<128x16xbf16>
    %c0_14 = arith.constant 0 : index
    %c0_15 = arith.constant 0 : index
    %19 = vector.load %arg7[%c0_14, %c0_15] : memref<1x16xf32, #tpu.memory_space<vmem>>, vector<1x16xf32>
    %cst_16 = arith.constant dense<0.000000e+00> : vector<40x16xf32>
    %20 = tpu.matmul %17, %18, %cst_16 {dimension_numbers = #tpu.dot_dimension_numbers<[1], [0], [0], [1], [0, 0, 1, 1], [], []>} : vector<40x128xbf16>, vector<128x16xbf16>, vector<40x16xf32> -> vector<40x16xf32>
    %21 = vector.broadcast %19 : vector<1x16xf32> to vector<40x16xf32>
    %22 = arith.addf %20, %21 : vector<40x16xf32>
    %c0_17 = arith.constant 0 : index
    %c0_18 = arith.constant 0 : index
    %23 = vector.load %arg8[%c0_17, %c0_18] : memref<40x16xf32, #tpu.memory_space<vmem>>, vector<40x16xf32>
    tpu.vector_store %arg8[%c0_17, %c0_18], %22 {strides = array<i32>} : memref<40x16xf32, #tpu.memory_space<vmem>>, vector<40x16xf32>,
    return
  }
  func.func @transform_0(%arg0: i32) -> (i32, i32) {
    %c0_i32 = arith.constant 0 : i32
    %c0_i32_0 = arith.constant 0 : i32
    return %arg0, %c0_i32 : i32, i32
  }
  func.func @transform_1(%arg0: i32) -> (i32, i32) {
    %c0_i32 = arith.constant 0 : i32
    %c0_i32_0 = arith.constant 0 : i32
    %c0_i32_1 = arith.constant 0 : i32
    return %c0_i32, %c0_i32_0 : i32, i32
  }
  func.func @transform_2(%arg0: i32) -> (i32, i32) {
    %c0_i32 = arith.constant 0 : i32
    %c0_i32_0 = arith.constant 0 : i32
    %c0_i32_1 = arith.constant 0 : i32
    return %c0_i32, %c0_i32_0 : i32, i32
  }
  func.func @transform_3(%arg0: i32) -> (i32, i32) {
    %c0_i32 = arith.constant 0 : i32
    %c0_i32_0 = arith.constant 0 : i32
    %c0_i32_1 = arith.constant 0 : i32
    return %c0_i32, %c0_i32_0 : i32, i32
  }
  func.func @transform_4(%arg0: i32) -> (i32, i32) {
    %c0_i32 = arith.constant 0 : i32
    %c0_i32_0 = arith.constant 0 : i32
    %c0_i32_1 = arith.constant 0 : i32
    return %c0_i32, %c0_i32_0 : i32, i32
  }
  func.func @transform_5(%arg0: i32) -> (i32, i32) {
    %c0_i32 = arith.constant 0 : i32
    %c0_i32_0 = arith.constant 0 : i32
    %c0_i32_1 = arith.constant 0 : i32
    return %c0_i32, %c0_i32_0 : i32, i32
  }
  func.func @transform_6(%arg0: i32) -> (i32, i32) {
    %c0_i32 = arith.constant 0 : i32
    %c0_i32_0 = arith.constant 0 : i32
    %c0_i32_1 = arith.constant 0 : i32
    return %c0_i32, %c0_i32_0 : i32, i32
  }
  func.func @transform_7(%arg0: i32) -> (i32, i32) {
    %c0_i32 = arith.constant 0 : i32
    %c0_i32_0 = arith.constant 0 : i32
    return %arg0, %c0_i32 : i32, i32
  }
}

</mosaic_0001>

<llo_original>
// kernel: tpu_custom_call.1
$region0: #{tpu_custom_call.1}
  #allocation0 [shape = 'u32[]', space=smem, size = 0x4, offset = 0x4, fixed_abs, tag = 'smem constant byte address 0x4 - core index']
  #allocation1 [shape = 'u32[144,128]{1,0:T(1,128)}', space=vmem, size = 0x12000, scoped, tag = 'internal scratch']
  %s0 = inlined_call_operand.vmem [shape: f32[320,32], index: 0, kind: input, shape index: {}]
  %s1 = inlined_call_operand.vmem [shape: bf16[32,128], index: 1, kind: input, shape index: {}]
  %s2 = inlined_call_operand.vmem [shape: f32[1,128], index: 2, kind: input, shape index: {}]
  %s3 = inlined_call_operand.vmem [shape: bf16[128,128], index: 3, kind: input, shape index: {}]
  %s4 = inlined_call_operand.vmem [shape: f32[1,128], index: 4, kind: input, shape index: {}]
  %s5 = inlined_call_operand.vmem [shape: bf16[128,16], index: 5, kind: input, shape index: {}]
  %s6 = inlined_call_operand.vmem [shape: f32[1,16], index: 6, kind: input, shape index: {}]
  %s7 = inlined_call_operand.vmem [shape: f32[320,16], index: 7, kind: output, shape index: {}]
  %s8 = sld [smem:[#allocation0]]
  $region61: #{tpu_custom_call.1} parent=0
    _
  %s10 = ssub.s32 1, %s8
  %s11 = scalar_select 0, %s10, %s8
  loop: start=0, step=1, limit=10
  $region2: #{tpu_custom_call.1} parent=0 // loop_pre_header
    _
  $region3: #{tpu_custom_call.1} parent=0 // loop_header
    %s13 = sphi 0, %s17
    %p14 = scmp.ge.s32.totalorder %s13, 10
    %s23 = sphi 0, %s25
    %s26 = sphi 0, %s23
    %s27 = sphi 0, %s26
    %s43 = sphi 0, %s27
    %s47 = sphi 0, %s47
    %s49 = sphi 0, %s47
    %s50 = sphi 0, %s49
    %s64 = sphi 0, %s50
    %s68 = sphi 0, %s68
    %s70 = sphi 0, %s68
    %s71 = sphi 0, %s70
    %s85 = sphi 0, %s71
    %s89 = sphi 0, %s89
    %s91 = sphi 0, %s89
    %s92 = sphi 0, %s91
    %s106 = sphi 0, %s92
    %s110 = sphi 0, %s110
    %s112 = sphi 0, %s110
    %s113 = sphi 0, %s112
    %s127 = sphi 0, %s113
    %s131 = sphi 0, %s131
    %s133 = sphi 0, %s131
    %s134 = sphi 0, %s133
    %s148 = sphi 0, %s134
    %s152 = sphi 0, %s152
    %s154 = sphi 0, %s152
    %s155 = sphi 0, %s154
    %s169 = sphi 0, %s155
    %s175 = sphi 0, %s177
    %s178 = sphi 0, %s175
    %s179 = sphi 0, %s178
    %s195 = sphi 0, %s179
  $region4: #{tpu_custom_call.1} parent=0 // loop_header_branch
    %16 = sbr.rel (%p14) target = $region8
  $region5: #{tpu_custom_call.1} parent=0 // loop_body
    %s18 = ssub.s32 %s13, 1
    %s19 = ssub.s32 %s13, 2
    %s20 = sadd.s32 %s13, 1
    %s21 = ssub.s32 %s13, %s20
    %p22 = scmp.eq.s32.totalorder %s21, 0
    %s24 = sadd.s32 %s23, 1
    %s25 = scalar_select %p22, %s23, %s24
    %p28 = pneg %p22
    %p29 = scmp.eq.s32.totalorder %s13, 7
    %p30 = por %p28, %p29
    %p31 = scmp.ne.s32.totalorder %s23, %s26
    %p32 = scmp.eq.s32.totalorder %s13, 0
    %p33 = por %p31, %p32
    %p34 = scmp.ne.s32.totalorder %s23, %s26
    %p35 = scmp.eq.s32.totalorder %s18, 7
    %p36 = por %p34, %p35
    %p37 = scmp.ne.s32.totalorder %s26, %s27
    %p38 = scmp.eq.s32.totalorder %s18, 0
    %p39 = por %p37, %p38
    %p40 = scmp.ne.s32.totalorder %s26, %s27
    %p41 = scmp.eq.s32.totalorder %s19, 7
    %p42 = por %p40, %p41
    %p44 = scmp.ne.s32.totalorder %s27, %s43
    %p45 = scmp.eq.s32.totalorder %s19, 0
    %p46 = por %p44, %p45
    %s48 = sadd.s32 %s47, 1
    %p51 = scmp.eq.s32.totalorder %s13, 7
    %p52 = scmp.ne.s32.totalorder %s47, %s49
    %p53 = scmp.eq.s32.totalorder %s13, 0
    %p54 = por %p52, %p53
    %p55 = scmp.ne.s32.totalorder %s47, %s49
    %p56 = scmp.eq.s32.totalorder %s18, 7
    %p57 = por %p55, %p56
    %p58 = scmp.ne.s32.totalorder %s49, %s50
    %p59 = scmp.eq.s32.totalorder %s18, 0
    %p60 = por %p58, %p59
    %p61 = scmp.ne.s32.totalorder %s49, %s50
    %p62 = scmp.eq.s32.totalorder %s19, 7
    %p63 = por %p61, %p62
    %p65 = scmp.ne.s32.totalorder %s50, %s64
    %p66 = scmp.eq.s32.totalorder %s19, 0
    %p67 = por %p65, %p66
    %s69 = sadd.s32 %s68, 1
    %p72 = scmp.eq.s32.totalorder %s13, 7
    %p73 = scmp.ne.s32.totalorder %s68, %s70
    %p74 = scmp.eq.s32.totalorder %s13, 0
    %p75 = por %p73, %p74
    %p76 = scmp.ne.s32.totalorder %s68, %s70
    %p77 = scmp.eq.s32.totalorder %s18, 7
    %p78 = por %p76, %p77
    %p79 = scmp.ne.s32.totalorder %s70, %s71
    %p80 = scmp.eq.s32.totalorder %s18, 0
    %p81 = por %p79, %p80
    %p82 = scmp.ne.s32.totalorder %s70, %s71
    %p83 = scmp.eq.s32.totalorder %s19, 7
    %p84 = por %p82, %p83
    %p86 = scmp.ne.s32.totalorder %s71, %s85
    %p87 = scmp.eq.s32.totalorder %s19, 0
    %p88 = por %p86, %p87
    %s90 = sadd.s32 %s89, 1
    %p93 = scmp.eq.s32.totalorder %s13, 7
    %p94 = scmp.ne.s32.totalorder %s89, %s91
    %p95 = scmp.eq.s32.totalorder %s13, 0
    %p96 = por %p94, %p95
    %p97 = scmp.ne.s32.totalorder %s89, %s91
    %p98 = scmp.eq.s32.totalorder %s18, 7
    %p99 = por %p97, %p98
    %p100 = scmp.ne.s32.totalorder %s91, %s92
    %p101 = scmp.eq.s32.totalorder %s18, 0
    %p102 = por %p100, %p101
    %p103 = scmp.ne.s32.totalorder %s91, %s92
    %p104 = scmp.eq.s32.totalorder %s19, 7
    %p105 = por %p103, %p104
    %p107 = scmp.ne.s32.totalorder %s92, %s106
    %p108 = scmp.eq.s32.totalorder %s19, 0
    %p109 = por %p107, %p108
    %s111 = sadd.s32 %s110, 1
    %p114 = scmp.eq.s32.totalorder %s13, 7
    %p115 = scmp.ne.s32.totalorder %s110, %s112
    %p116 = scmp.eq.s32.totalorder %s13, 0
    %p117 = por %p115, %p116
    %p118 = scmp.ne.s32.totalorder %s110, %s112
    %p119 = scmp.eq.s32.totalorder %s18, 7
    %p120 = por %p118, %p119
    %p121 = scmp.ne.s32.totalorder %s112, %s113
    %p122 = scmp.eq.s32.totalorder %s18, 0
    %p123 = por %p121, %p122
    %p124 = scmp.ne.s32.totalorder %s112, %s113
    %p125 = scmp.eq.s32.totalorder %s19, 7
    %p126 = por %p124, %p125
    %p128 = scmp.ne.s32.totalorder %s113, %s127
    %p129 = scmp.eq.s32.totalorder %s19, 0
    %p130 = por %p128, %p129
    %s132 = sadd.s32 %s131, 1
    %p135 = scmp.eq.s32.totalorder %s13, 7
    %p136 = scmp.ne.s32.totalorder %s131, %s133
    %p137 = scmp.eq.s32.totalorder %s13, 0
    %p138 = por %p136, %p137
    %p139 = scmp.ne.s32.totalorder %s131, %s133
    %p140 = scmp.eq.s32.totalorder %s18, 7
    %p141 = por %p139, %p140
    %p142 = scmp.ne.s32.totalorder %s133, %s134
    %p143 = scmp.eq.s32.totalorder %s18, 0
    %p144 = por %p142, %p143
    %p145 = scmp.ne.s32.totalorder %s133, %s134
    %p146 = scmp.eq.s32.totalorder %s19, 7
    %p147 = por %p145, %p146
    %p149 = scmp.ne.s32.totalorder %s134, %s148
    %p150 = scmp.eq.s32.totalorder %s19, 0
    %p151 = por %p149, %p150
    %s153 = sadd.s32 %s152, 1
    %p156 = scmp.eq.s32.totalorder %s13, 7
    %p157 = scmp.ne.s32.totalorder %s152, %s154
    %p158 = scmp.eq.s32.totalorder %s13, 0
    %p159 = por %p157, %p158
    %p160 = scmp.ne.s32.totalorder %s152, %s154
    %p161 = scmp.eq.s32.totalorder %s18, 7
    %p162 = por %p160, %p161
    %p163 = scmp.ne.s32.totalorder %s154, %s155
    %p164 = scmp.eq.s32.totalorder %s18, 0
    %p165 = por %p163, %p164
    %p166 = scmp.ne.s32.totalorder %s154, %s155
    %p167 = scmp.eq.s32.totalorder %s19, 7
    %p168 = por %p166, %p167
    %p170 = scmp.ne.s32.totalorder %s155, %s169
    %p171 = scmp.eq.s32.totalorder %s19, 0
    %p172 = por %p170, %p171
    %s173 = ssub.s32 %s13, %s20
    %p174 = scmp.eq.s32.totalorder %s173, 0
    %s176 = sadd.s32 %s175, 1
    %s177 = scalar_select %p174, %s175, %s176
    %p180 = pneg %p174
    %p181 = scmp.eq.s32.totalorder %s13, 7
    %p182 = por %p180, %p181
    %p183 = scmp.ne.s32.totalorder %s175, %s178
    %p184 = scmp.eq.s32.totalorder %s13, 0
    %p185 = por %p183, %p184
    %p186 = scmp.ne.s32.totalorder %s175, %s178
    %p187 = scmp.eq.s32.totalorder %s18, 7
    %p188 = por %p186, %p187
    %p189 = scmp.ne.s32.totalorder %s178, %s179
    %p190 = scmp.eq.s32.totalorder %s18, 0
    %p191 = por %p189, %p190
    %p192 = scmp.ne.s32.totalorder %s178, %s179
    %p193 = scmp.eq.s32.totalorder %s19, 7
    %p194 = por %p192, %p193
    %p196 = scmp.ne.s32.totalorder %s179, %s195
    %p197 = scmp.eq.s32.totalorder %s19, 0
    %p198 = por %p196, %p197
    %p199 = scmp.le.s32.totalorder 1, %s13
    %p200 = scmp.lt.s32.totalorder %s13, 9
    %p201 = pnand %p199, %p200
    %p202 = pneg %p201
    // Predicated region
    $region9: #{tpu_custom_call.1} parent=5 // pred_check
      _
    $region10: #{tpu_custom_call.1} parent=5 // pred_check_branch
      %204 = sbr.rel (%p201) target = $region12
    $region11: #{tpu_custom_call.1} parent=5 // pred_region
      %s205 = ssub.s32 %s13, 1
      // Predicated region
      $region13: #{tpu_custom_call.1} parent=11 // pred_check
        %p206 = pneg %p60
      $region14: #{tpu_custom_call.1} parent=11 // pred_check_branch
        %208 = sbr.rel (%p206) target = $region16
      $region15: #{tpu_custom_call.1} parent=11 // pred_region
        _
      $region16: #{tpu_custom_call.1} parent=11 // pred_fallthru
        _
      // Predicated region
      $region17: #{tpu_custom_call.1} parent=11 // pred_check
        %p209 = pneg %p81
      $region18: #{tpu_custom_call.1} parent=11 // pred_check_branch
        %211 = sbr.rel (%p209) target = $region20
      $region19: #{tpu_custom_call.1} parent=11 // pred_region
        _
      $region20: #{tpu_custom_call.1} parent=11 // pred_fallthru
        _
      // Predicated region
      $region21: #{tpu_custom_call.1} parent=11 // pred_check
        %p212 = pneg %p102
      $region22: #{tpu_custom_call.1} parent=11 // pred_check_branch
        %214 = sbr.rel (%p212) target = $region24
      $region23: #{tpu_custom_call.1} parent=11 // pred_region
        _
      $region24: #{tpu_custom_call.1} parent=11 // pred_fallthru
        _
      // Predicated region
      $region25: #{tpu_custom_call.1} parent=11 // pred_check
        %p215 = pneg %p123
      $region26: #{tpu_custom_call.1} parent=11 // pred_check_branch
        %217 = sbr.rel (%p215) target = $region28
      $region27: #{tpu_custom_call.1} parent=11 // pred_region
        _
      $region28: #{tpu_custom_call.1} parent=11 // pred_fallthru
        _
      // Predicated region
      $region29: #{tpu_custom_call.1} parent=11 // pred_check
        %p218 = pneg %p144
      $region30: #{tpu_custom_call.1} parent=11 // pred_check_branch
        %220 = sbr.rel (%p218) target = $region32
      $region31: #{tpu_custom_call.1} parent=11 // pred_region
        _
      $region32: #{tpu_custom_call.1} parent=11 // pred_fallthru
        _
      // Predicated region
      $region33: #{tpu_custom_call.1} parent=11 // pred_check
        %p221 = pneg %p165
      $region34: #{tpu_custom_call.1} parent=11 // pred_check_branch
        %223 = sbr.rel (%p221) target = $region36
      $region35: #{tpu_custom_call.1} parent=11 // pred_region
        _
      $region36: #{tpu_custom_call.1} parent=11 // pred_fallthru
        _
    $region12: #{tpu_custom_call.1} parent=5 // pred_fallthru
      _
    %p224 = scmp.lt.s32.totalorder %s13, 8
    // Predicated region
    $region37: #{tpu_custom_call.1} parent=5 // pred_check
      %p225 = pneg %p224
    $region38: #{tpu_custom_call.1} parent=5 // pred_check_branch
      %227 = sbr.rel (%p225) target = $region40
    $region39: #{tpu_custom_call.1} parent=5 // pred_region
      // Predicated region
      $region41: #{tpu_custom_call.1} parent=39 // pred_check
        %p228 = pneg %p33
      $region42: #{tpu_custom_call.1} parent=39 // pred_check_branch
        %230 = sbr.rel (%p228) target = $region44
      $region43: #{tpu_custom_call.1} parent=39 // pred_region
        %s231 = smul.u32 5, %s13
        %p232 = scmp.lt.s32.totalorder %s231, 39
        %s233 = scalar_select %p232, %s231, 39
        %s234 = smul.addr %s233, 8
        %s235 = scalar_lea.vmem %s0, %s234
        %s236 = smul.u32 5, %s13
      $region44: #{tpu_custom_call.1} parent=39 // pred_fallthru
        _
    $region40: #{tpu_custom_call.1} parent=5 // pred_fallthru
      _
    %p237 = scmp.le.s32.totalorder 1, %s13
    %p238 = scmp.lt.s32.totalorder %s13, 9
    %p239 = pnand %p237, %p238
    %p240 = pneg %p239
    // Predicated region
    $region45: #{tpu_custom_call.1} parent=5 // pred_check
      _
    $region46: #{tpu_custom_call.1} parent=5 // pred_check_branch
      %242 = sbr.rel (%p239) target = $region48
    $region47: #{tpu_custom_call.1} parent=5 // pred_region
      %s243 = ssub.s32 %s13, 1
      %s244 = smul.u32 5, %s18
      %p245 = scmp.lt.s32.totalorder %s244, 39
      %s246 = scalar_select %p245, %s244, 39
      %s247 = smul.addr %s246, 8
      %s248 = scalar_lea.vmem %s0, %s247
      %p249 = pneg %p39
      %p250 = pneg %p36
      %p251 = pneg %p60
      %p252 = pneg %p57
      %p253 = pneg %p81
      %p254 = pneg %p78
      %p255 = pneg %p102
      %p256 = pneg %p99
      %p257 = pneg %p123
      %p258 = pneg %p120
      %p259 = pneg %p144
      %p260 = pneg %p141
      %p261 = pneg %p165
      %p262 = pneg %p162
      %p263 = pneg %p191
      %p264 = pneg %p188
      %s265 = smul.u32 5, %s18
      %p266 = scmp.lt.s32.totalorder %s265, 39
      %s267 = scalar_select %p266, %s265, 39
      %s268 = smul.addr %s267, 8
      %s269 = scalar_lea.vmem %s7, %s268
      %s270 = smul.u32 5, %s18
      %p271 = scmp.lt.s32.totalorder %s270, 39
      %s272 = scalar_select %p271, %s270, 39
      %s273 = smul.addr %s272, 8
      %s274 = scalar_lea.vmem %s0, %s273
      %s275 = smul.u32 5, %s18
      %s276 = smul.u32 5, %s18
      %p277 = scmp.lt.s32.totalorder %s276, 39
      %s278 = scalar_select %p277, %s276, 39
      %s279 = smul.addr %s278, 8
      %s280 = scalar_lea.vmem %s7, %s279
      %s281 = smul.u32 5, %s18
      %v283 = vld [vmem:[%s274] sm:$0xff]
      %v284 = vld [vmem:[%s274 + $0x8] sm:$0xff]
      %v285 = vld [vmem:[%s274 + $0x10] sm:$0xff]
      %v286 = vld [vmem:[%s274 + $0x18] sm:$0xff]
      %v287 = vld [vmem:[%s274 + $0x20] sm:$0xff]
      %v288 = vpack.c.bf16 %v284, %v283
      %v289 = vpack.c.bf16 %v286, %v285
      %v290 = vpack.c.bf16 %v287, %v287
      %v291 = vld [vmem:[%s1] sm:$0xf]
      %v292 = vld [vmem:[%s1 + $0x4] sm:$0xf]
      %v293 = vld [vmem:[%s1 + $0x8] sm:$0xf]
      %v294 = vld [vmem:[%s1 + $0xc] sm:$0xf]
      %v295 = vld [vmem:[%s2] sm:$0x1]
      %v297 = vlaneseq
      %v298 = vshrl.u32 %v297, 7
      %v299 = vsub.s32 0, %v298
      %v300 = vrot.slane %v295, %v299
      %v306 = vunpack.c.l.b16 %v291
      %v307 = vunpack.c.l.b16 %v292
      %v308 = vunpack.c.l.b16 %v293
      %v309 = vunpack.c.l.b16 %v294
      %v310 = vpack.c.b16 %v307, %v306
      %v311 = vpack.c.b16 %v309, %v308
      %vm314 = vcmask 261120
      %v316 = vsel %vm314, %v288, 0
      %v319 = vsel %vm314, %v289, 0
      %v322 = vsel %vm314, %v290, 0
      %324 = vmatprep.subr.bf16.mxu0 0
      %325 = vmatpush1.bf16.msra.mxu0 0
      %326 = vmatprep.subr.bf16.mxu0 0
      %327 = vmatpush1.bf16.msra.mxu0 0
      %328 = vmatprep.subr.bf16.mxu0 0
      %329 = vmatpush1.bf16.msra.mxu0 0
      %330 = vmatprep.subr.bf16.mxu0 0
      %331 = vmatpush1.bf16.msra.mxu0 0
      %332 = vmatprep.subr.bf16.mxu0 0
      %333 = vmatpush1.bf16.msra.mxu0 0
      %334 = vmatprep.subr.bf16.mxu0 0
      %335 = vmatpush1.bf16.msra.mxu0 0
      %336 = vmatprep.subr.bf16.mxu0 0
      %337 = vmatpush1.bf16.msra.mxu0 %v311
      %338 = vmatprep.subr.bf16.mxu0 0
      %339 = vmatpush1.bf16.msra.mxu0 %v310
      %340 = vmatprep.subr.bf16.mxu0 0
      %341 = vmatpush2.bf16.msra.mxu0 0
      %342 = vmatprep.subr.bf16.mxu0 0
      %343 = vmatpush2.bf16.msra.mxu0 0
      %344 = vmatprep.subr.bf16.mxu0 0
      %345 = vmatpush2.bf16.msra.mxu0 0
      %346 = vmatprep.subr.bf16.mxu0 0
      %347 = vmatpush2.bf16.msra.mxu0 0
      %348 = vmatprep.subr.bf16.mxu0 0
      %349 = vmatpush2.bf16.msra.mxu0 0
      %350 = vmatprep.subr.bf16.mxu0 0
      %351 = vmatpush2.bf16.msra.mxu0 0
      %352 = vmatprep.subr.bf16.mxu0 0
      %353 = vmatpush2.bf16.msra.mxu0 0
      %354 = vmatprep.subr.bf16.mxu0 0
      %355 = vmatpush2.bf16.msra.mxu0 0
      %356 = vmatprep.mubr.bf16.mxu0 0
      %357 = vmatmul.mubr.bf16.gmra.mxu0 %v316
      %v358 = vpop.f32.mrf.mxu0
      %v359 = vadd.f32 %v300, %v358
      %v360 = vpop.f32.mrf.mxu0
      %v361 = vpop.f32.mrf.mxu0
      %v362 = vadd.f32 %v300, %v361
      %v363 = vpop.f32.mrf.mxu0
      %364 = vmatprep.mubr.bf16.mxu0 0
      %365 = vmatmul.mubr.bf16.gmra.mxu0 %v319
      %v366 = vpop.f32.mrf.mxu0
      %v367 = vadd.f32 %v300, %v366
      %v368 = vpop.f32.mrf.mxu0
      %v369 = vpop.f32.mrf.mxu0
      %v370 = vadd.f32 %v300, %v369
      %v371 = vpop.f32.mrf.mxu0
      %372 = vmatprep.mubr.bf16.mxu0 0
      %373 = vmatmul.mubr.bf16.gmra.mxu0 %v322
      %v374 = vpop.f32.mrf.mxu0
      %v375 = vadd.f32 %v300, %v374
      %v376 = vpop.f32.mrf.mxu0
      %v377 = vpop.f32.mrf.mxu0
      %v378 = vpop.f32.mrf.mxu0
      %379 = vdwg.mxu0
      %v380 = vmax.f32 %v359, 0.0
      %v381 = vmax.f32 %v362, 0.0
      %v382 = vmax.f32 %v367, 0.0
      %v383 = vmax.f32 %v370, 0.0
      %v384 = vmax.f32 %v375, 0.0
      %v385 = vpack.c.bf16 %v381, %v380
      %v386 = vpack.c.bf16 %v383, %v382
      %v387 = vpack.c.bf16 %v384, %v384
      %v388 = vld [vmem:[%s3] sm:$0xf]
      %v389 = vld [vmem:[%s3 + $0x4] sm:$0xf]
      %v390 = vld [vmem:[%s3 + $0x8] sm:$0xf]
      %v391 = vld [vmem:[%s3 + $0xc] sm:$0xf]
      %v392 = vld [vmem:[%s3 + $0x10] sm:$0xf]
      %v393 = vld [vmem:[%s3 + $0x14] sm:$0xf]
      %v394 = vld [vmem:[%s3 + $0x18] sm:$0xf]
      %v395 = vld [vmem:[%s3 + $0x1c] sm:$0xf]
      %v396 = vld [vmem:[%s3 + $0x20] sm:$0xf]
      %v397 = vld [vmem:[%s3 + $0x24] sm:$0xf]
      %v398 = vld [vmem:[%s3 + $0x28] sm:$0xf]
      %v399 = vld [vmem:[%s3 + $0x2c] sm:$0xf]
      %v400 = vld [vmem:[%s3 + $0x30] sm:$0xf]
      %v401 = vld [vmem:[%s3 + $0x34] sm:$0xf]
      %v402 = vld [vmem:[%s3 + $0x38] sm:$0xf]
      %v403 = vld [vmem:[%s3 + $0x3c] sm:$0xf]
      %v404 = vld [vmem:[%s4] sm:$0x1]
      %v406 = vlaneseq
      %v407 = vshrl.u32 %v406, 7
      %v408 = vsub.s32 0, %v407
      %v409 = vrot.slane %v404, %v408
      %v427 = vunpack.c.l.b16 %v388
      %v428 = vunpack.c.l.b16 %v389
      %v429 = vunpack.c.l.b16 %v390
      %v430 = vunpack.c.l.b16 %v391
      %v431 = vunpack.c.l.b16 %v392
      %v432 = vunpack.c.l.b16 %v393
      %v433 = vunpack.c.l.b16 %v394
      %v434 = vunpack.c.l.b16 %v395
      %v435 = vunpack.c.l.b16 %v396
      %v436 = vunpack.c.l.b16 %v397
      %v437 = vunpack.c.l.b16 %v398
      %v438 = vunpack.c.l.b16 %v399
      %v439 = vunpack.c.l.b16 %v400
      %v440 = vunpack.c.l.b16 %v401
      %v441 = vunpack.c.l.b16 %v402
      %v442 = vunpack.c.l.b16 %v403
      %v443 = vpack.c.b16 %v428, %v427
      %v444 = vpack.c.b16 %v430, %v429
      %v445 = vpack.c.b16 %v432, %v431
      %v446 = vpack.c.b16 %v434, %v433
      %v447 = vpack.c.b16 %v436, %v435
      %v448 = vpack.c.b16 %v438, %v437
      %v449 = vpack.c.b16 %v440, %v439
      %v450 = vpack.c.b16 %v442, %v441
      %459 = vmatprep.subr.bf16.mxu0 0
      %460 = vmatpush1.bf16.msra.mxu0 %v450
      %461 = vmatprep.subr.bf16.mxu0 0
      %462 = vmatpush1.bf16.msra.mxu0 %v449
      %463 = vmatprep.subr.bf16.mxu0 0
      %464 = vmatpush1.bf16.msra.mxu0 %v448
      %465 = vmatprep.subr.bf16.mxu0 0
      %466 = vmatpush1.bf16.msra.mxu0 %v447
      %467 = vmatprep.subr.bf16.mxu0 0
      %468 = vmatpush1.bf16.msra.mxu0 %v446
      %469 = vmatprep.subr.bf16.mxu0 0
      %470 = vmatpush1.bf16.msra.mxu0 %v445
      %471 = vmatprep.subr.bf16.mxu0 0
      %472 = vmatpush1.bf16.msra.mxu0 %v444
      %473 = vmatprep.subr.bf16.mxu0 0
      %474 = vmatpush1.bf16.msra.mxu0 %v443
      %475 = vmatprep.subr.bf16.mxu0 0
      %476 = vmatpush2.bf16.msra.mxu0 0
      %477 = vmatprep.subr.bf16.mxu0 0
      %478 = vmatpush2.bf16.msra.mxu0 0
      %479 = vmatprep.subr.bf16.mxu0 0
      %480 = vmatpush2.bf16.msra.mxu0 0
      %481 = vmatprep.subr.bf16.mxu0 0
      %482 = vmatpush2.bf16.msra.mxu0 0
      %483 = vmatprep.subr.bf16.mxu0 0
      %484 = vmatpush2.bf16.msra.mxu0 0
      %485 = vmatprep.subr.bf16.mxu0 0
      %486 = vmatpush2.bf16.msra.mxu0 0
      %487 = vmatprep.subr.bf16.mxu0 0
      %488 = vmatpush2.bf16.msra.mxu0 0
      %489 = vmatprep.subr.bf16.mxu0 0
      %490 = vmatpush2.bf16.msra.mxu0 0
      %491 = vmatprep.mubr.bf16.mxu0 0
      %492 = vmatmul.mubr.bf16.gmra.mxu0 %v385
      %v493 = vpop.f32.mrf.mxu0
      %v494 = vadd.f32 %v409, %v493
      %v495 = vpop.f32.mrf.mxu0
      %v496 = vpop.f32.mrf.mxu0
      %v497 = vadd.f32 %v409, %v496
      %v498 = vpop.f32.mrf.mxu0
      %499 = vmatprep.mubr.bf16.mxu0 0
      %500 = vmatmul.mubr.bf16.gmra.mxu0 %v386
      %v501 = vpop.f32.mrf.mxu0
      %v502 = vadd.f32 %v409, %v501
      %v503 = vpop.f32.mrf.mxu0
      %v504 = vpop.f32.mrf.mxu0
      %v505 = vadd.f32 %v409, %v504
      %v506 = vpop.f32.mrf.mxu0
      %507 = vmatprep.mubr.bf16.mxu0 0
      %508 = vmatmul.mubr.bf16.gmra.mxu0 %v387
      %v509 = vpop.f32.mrf.mxu0
      %v510 = vadd.f32 %v409, %v509
      %v511 = vpop.f32.mrf.mxu0
      %v512 = vpop.f32.mrf.mxu0
      %v513 = vpop.f32.mrf.mxu0
      %514 = vdwg.mxu0
      %v515 = vmax.f32 %v494, 0.0
      %v516 = vmax.f32 %v497, 0.0
      %v517 = vmax.f32 %v502, 0.0
      %v518 = vmax.f32 %v505, 0.0
      %v519 = vmax.f32 %v510, 0.0
      %v520 = vpack.c.bf16 %v516, %v515
      %v521 = vpack.c.bf16 %v518, %v517
      %v522 = vpack.c.bf16 %v519, %v519
      %v523 = vld [vmem:[%s5] sm:$0xf]
      %v524 = vld [vmem:[%s5 + $0x4] sm:$0xf]
      %v525 = vld [vmem:[%s5 + $0x8] sm:$0xf]
      %v526 = vld [vmem:[%s5 + $0xc] sm:$0xf]
      %v527 = vld [vmem:[%s5 + $0x10] sm:$0xf]
      %v528 = vld [vmem:[%s5 + $0x14] sm:$0xf]
      %v529 = vld [vmem:[%s5 + $0x18] sm:$0xf]
      %v530 = vld [vmem:[%s5 + $0x1c] sm:$0xf]
      %v531 = vld [vmem:[%s5 + $0x20] sm:$0xf]
      %v532 = vld [vmem:[%s5 + $0x24] sm:$0xf]
      %v533 = vld [vmem:[%s5 + $0x28] sm:$0xf]
      %v534 = vld [vmem:[%s5 + $0x2c] sm:$0xf]
      %v535 = vld [vmem:[%s5 + $0x30] sm:$0xf]
      %v536 = vld [vmem:[%s5 + $0x34] sm:$0xf]
      %v537 = vld [vmem:[%s5 + $0x38] sm:$0xf]
      %v538 = vld [vmem:[%s5 + $0x3c] sm:$0xf]
      %v539 = vld [vmem:[%s6] sm:$0x1]
      %v541 = vlaneseq
      %v542 = vshrl.u32 %v541, 7
      %v543 = vsub.s32 0, %v542
      %v544 = vrot.slane %v539, %v543
      %v562 = vunpack.c.l.b16 %v523
      %v563 = vunpack.c.l.b16 %v524
      %v564 = vunpack.c.l.b16 %v525
      %v565 = vunpack.c.l.b16 %v526
      %v566 = vunpack.c.l.b16 %v527
      %v567 = vunpack.c.l.b16 %v528
      %v568 = vunpack.c.l.b16 %v529
      %v569 = vunpack.c.l.b16 %v530
      %v570 = vunpack.c.l.b16 %v531
      %v571 = vunpack.c.l.b16 %v532
      %v572 = vunpack.c.l.b16 %v533
      %v573 = vunpack.c.l.b16 %v534
      %v574 = vunpack.c.l.b16 %v535
      %v575 = vunpack.c.l.b16 %v536
      %v576 = vunpack.c.l.b16 %v537
      %v577 = vunpack.c.l.b16 %v538
      %v578 = vpack.c.b16 %v563, %v562
      %v579 = vpack.c.b16 %v565, %v564
      %v580 = vpack.c.b16 %v567, %v566
      %v581 = vpack.c.b16 %v569, %v568
      %v582 = vpack.c.b16 %v571, %v570
      %v583 = vpack.c.b16 %v573, %v572
      %v584 = vpack.c.b16 %v575, %v574
      %v585 = vpack.c.b16 %v577, %v576
      %594 = vmatprep.subr.bf16.mxu0 0
      %595 = vmatpush1.bf16.msra.mxu0 %v585
      %596 = vmatprep.subr.bf16.mxu0 0
      %597 = vmatpush1.bf16.msra.mxu0 %v584
      %598 = vmatprep.subr.bf16.mxu0 0
      %599 = vmatpush1.bf16.msra.mxu0 %v583
      %600 = vmatprep.subr.bf16.mxu0 0
      %601 = vmatpush1.bf16.msra.mxu0 %v582
      %602 = vmatprep.subr.bf16.mxu0 0
      %603 = vmatpush1.bf16.msra.mxu0 %v581
      %604 = vmatprep.subr.bf16.mxu0 0
      %605 = vmatpush1.bf16.msra.mxu0 %v580
      %606 = vmatprep.subr.bf16.mxu0 0
      %607 = vmatpush1.bf16.msra.mxu0 %v579
      %608 = vmatprep.subr.bf16.mxu0 0
      %609 = vmatpush1.bf16.msra.mxu0 %v578
      %610 = vmatprep.subr.bf16.mxu0 0
      %611 = vmatpush2.bf16.msra.mxu0 0
      %612 = vmatprep.subr.bf16.mxu0 0
      %613 = vmatpush2.bf16.msra.mxu0 0
      %614 = vmatprep.subr.bf16.mxu0 0
      %615 = vmatpush2.bf16.msra.mxu0 0
      %616 = vmatprep.subr.bf16.mxu0 0
      %617 = vmatpush2.bf16.msra.mxu0 0
      %618 = vmatprep.subr.bf16.mxu0 0
      %619 = vmatpush2.bf16.msra.mxu0 0
      %620 = vmatprep.subr.bf16.mxu0 0
      %621 = vmatpush2.bf16.msra.mxu0 0
      %622 = vmatprep.subr.bf16.mxu0 0
      %623 = vmatpush2.bf16.msra.mxu0 0
      %624 = vmatprep.subr.bf16.mxu0 0
      %625 = vmatpush2.bf16.msra.mxu0 0
      %626 = vmatprep.mubr.bf16.mxu0 0
      %627 = vmatmul.mubr.bf16.gmra.mxu0 %v520
      %v628 = vpop.f32.mrf.mxu0
      %v629 = vadd.f32 %v544, %v628
      %v630 = vpop.f32.mrf.mxu0
      %v631 = vpop.f32.mrf.mxu0
      %v632 = vadd.f32 %v544, %v631
      %v633 = vpop.f32.mrf.mxu0
      %634 = vmatprep.mubr.bf16.mxu0 0
      %635 = vmatmul.mubr.bf16.gmra.mxu0 %v521
      %v636 = vpop.f32.mrf.mxu0
      %v637 = vadd.f32 %v544, %v636
      %v638 = vpop.f32.mrf.mxu0
      %v639 = vpop.f32.mrf.mxu0
      %v640 = vadd.f32 %v544, %v639
      %v641 = vpop.f32.mrf.mxu0
      %642 = vmatprep.mubr.bf16.mxu0 0
      %643 = vmatmul.mubr.bf16.gmra.mxu0 %v522
      %v644 = vpop.f32.mrf.mxu0
      %v645 = vadd.f32 %v544, %v644
      %v646 = vpop.f32.mrf.mxu0
      %v647 = vpop.f32.mrf.mxu0
      %v648 = vpop.f32.mrf.mxu0
      %649 = vdwg.mxu0
      %vm650 = vcmask 130048
      %651 = vst.msk [vmem:[%s280] sm:$0xff] %vm650, %v629
      %652 = vst.msk [vmem:[%s280 + $0x8] sm:$0xff] %vm650, %v632
      %653 = vst.msk [vmem:[%s280 + $0x10] sm:$0xff] %vm650, %v637
      %654 = vst.msk [vmem:[%s280 + $0x18] sm:$0xff] %vm650, %v640
      %655 = vst.msk [vmem:[%s280 + $0x20] sm:$0xff] %vm650, %v645
      %s656 = smul.u32 5, %s18
      %p657 = scmp.lt.s32.totalorder %s656, 39
      %s658 = scalar_select %p657, %s656, 39
      %s659 = smul.addr %s658, 8
      %s660 = scalar_lea.vmem %s7, %s659
      // Predicated region
      $region49: #{tpu_custom_call.1} parent=47 // pred_check
        %p661 = pneg %p188
      $region50: #{tpu_custom_call.1} parent=47 // pred_check_branch
        %663 = sbr.rel (%p661) target = $region52
      $region51: #{tpu_custom_call.1} parent=47 // pred_region
        %s664 = smul.u32 5, %s18
      $region52: #{tpu_custom_call.1} parent=47 // pred_fallthru
        _
    $region48: #{tpu_custom_call.1} parent=5 // pred_fallthru
      _
    %p665 = scmp.le.s32.totalorder 2, %s13
    // Predicated region
    $region53: #{tpu_custom_call.1} parent=5 // pred_check
      %p666 = pneg %p665
    $region54: #{tpu_custom_call.1} parent=5 // pred_check_branch
      %668 = sbr.rel (%p666) target = $region56
    $region55: #{tpu_custom_call.1} parent=5 // pred_region
      %s669 = ssub.s32 %s13, 2
      // Predicated region
      $region57: #{tpu_custom_call.1} parent=55 // pred_check
        %p670 = pneg %p194
      $region58: #{tpu_custom_call.1} parent=55 // pred_check_branch
        %672 = sbr.rel (%p670) target = $region60
      $region59: #{tpu_custom_call.1} parent=55 // pred_region
        %s673 = smul.u32 5, %s19
        %p674 = scmp.lt.s32.totalorder %s673, 39
        %s675 = scalar_select %p674, %s673, 39
        %s676 = smul.addr %s675, 8
        %s677 = scalar_lea.vmem %s7, %s676
      $region60: #{tpu_custom_call.1} parent=55 // pred_fallthru
        _
    $region56: #{tpu_custom_call.1} parent=5 // pred_fallthru
      _
  $region6: #{tpu_custom_call.1} parent=0 // loop_footer
    %s17 = sadd.s32 1, %s13
  $region7: #{tpu_custom_call.1} parent=0 // loop_footer_branch
    %12 = sbr.rel target = $region3
  $region8: #{tpu_custom_call.1} parent=0 // loop_exit
    _

</llo_original>
